<compile_context>
chip_gen: v5e
topology: v5e:2x2
jax: 0.10.0
libtpu: 0.0.40
codegen_flags: <defaults>
</compile_context>

<pallas_src>
import functools
import math

import jax
import jax.numpy as jnp
from jax.experimental import pallas as pl
from jax.experimental.pallas import tpu as pltpu


def _pe_kernel(x_ref, out_ref, *, d_model: int, ln_M: float):
    # x_ref:   (1, TN)   float32  -- TN positions, lane-dense
    # out_ref: (2K, TN)  float32  -- rows 0..K-1 = sin, rows K..2K-1 = cos
    K = d_model // 2
    # div_term[j] = 1 / M ** (2*(2j)/d_model) = exp(-(4*j/d_model) * ln(M))
    j = jax.lax.broadcasted_iota(jnp.int32, (K, 1), 0).astype(jnp.float32)
    div = jnp.exp((-4.0 * ln_M / d_model) * j)            # (K, 1)
    arg = div * x_ref[...]                                # (K,1)*(1,TN) -> (K,TN)
    # Single fused, full-width (lane-dense) store of the whole output tile.
    out_ref[...] = jnp.concatenate([jnp.sin(arg), jnp.cos(arg)], axis=0)


def make_div_term(d_model: int, M: float) -> jnp.ndarray:
    # Torch-style formula, used only by the reference check.
    idx = jnp.arange(0, d_model, 2, dtype=jnp.float32)
    return 1.0 / (M ** (2.0 * idx / d_model))


def _round_up(n: int, m: int) -> int:
    return ((n + m - 1) // m) * m


def positional_encoding_vector(x: jnp.ndarray, d_model: int, M: float,
                               tile_n: int = 1024) -> jnp.ndarray:
    """x: [seq_len, batch, 1] float32 -> [seq_len, batch, d_model] float32."""
    S, B, C = x.shape
    assert C == 1, "this wrapper assumes the broadcast (last-dim==1) usage"
    assert d_model % 2 == 0
    assert tile_n % 128 == 0
    K = d_model // 2
    N = S * B

    # Lane-dense layout: positions on the lane axis, padded to the tile size.
    tile_n_eff = min(tile_n, _round_up(N, 128))   # shrink tile for tiny inputs
    N_pad = _round_up(N, tile_n_eff)              # no N % tile assert -> pad tail
    x2 = jnp.zeros((1, N_pad), jnp.float32).at[0, :N].set(
        x.reshape(N).astype(jnp.float32))

    kernel = functools.partial(_pe_kernel, d_model=d_model, ln_M=math.log(M))

    out_t = pl.pallas_call(
        kernel,
        out_shape=jax.ShapeDtypeStruct((2 * K, N_pad), jnp.float32),
        grid_spec=pltpu.PrefetchScalarGridSpec(
            num_scalar_prefetch=0,
            grid=(N_pad // tile_n_eff,),
            in_specs=[pl.BlockSpec((1, tile_n_eff), lambda i: (0, i))],
            out_specs=pl.BlockSpec((2 * K, tile_n_eff), lambda i: (0, i)),
        ),
        compiler_params=pltpu.CompilerParams(
            dimension_semantics=("parallel",)),
        cost_estimate=pl.CostEstimate(
            flops=N_pad * K,
            transcendentals=2 * N_pad * K,
            bytes_accessed=4 * (N_pad + 2 * K * N_pad)),
    )(x2)

    # Layout plumbing back to the PyTorch output layout [S, B, 2K].
    return out_t[:, :N].T.reshape(S, B, 2 * K)


def _reference(x, div_term):
    exp_div = div_term.reshape((1,) * (x.ndim - 1) + (-1,))
    arg = x * exp_div
    return jnp.concatenate([jnp.sin(arg), jnp.cos(arg)], axis=-1)


if __name__ == "__main__":
    d_model = 32          # -> K = 16 frequencies, output last dim = 32
    M = 10000.0
    seq_len, batch = 8, 2

    key = jax.random.PRNGKey(0)
    x = jax.random.normal(key, (seq_len, batch, 1), dtype=jnp.float32) * 5.0

    out = jax.block_until_ready(positional_encoding_vector(x, d_model, M))

    ref = _reference(x, make_div_term(d_model, M))
    assert out.shape == (seq_len, batch, d_model), out.shape
    assert jnp.allclose(out, ref, atol=1e-5, rtol=1e-5), "mismatch vs reference"

    print("KERNEL_OK")
</pallas_src>

<mosaic_0001>
module attributes {stable_mosaic.version = 11 : i64} {
  func.func @_pe_kernel(%arg0: i32, %arg1: memref<1x128xf32, #tpu.memory_space<vmem>>, %arg2: memref<32x128xf32, #tpu.memory_space<vmem>>) attributes {dimension_semantics = [#tpu.dimension_semantics<parallel>], iteration_bounds = array<i64: 1>, scalar_prefetch = 0 : i64, scratch_operands = 0 : i64, tpu.core_type = #tpu.core_type<tc>, window_params = [{transform_indices = @transform_0, window_bounds = array<i64: 1, 128>}, {transform_indices = @transform_1, window_bounds = array<i64: 32, 128>}]} {
    %0 = tpu.iota {dimensions = array<i32: 0>} : vector<16x1xi32>
    %1 = arith.sitofp %0 : vector<16x1xi32> to vector<16x1xf32>
    %cst = arith.constant -1.15129256 : f32
    %2 = vector.broadcast %cst : f32 to vector<16x1xf32>
    %3 = arith.mulf %2, %1 : vector<16x1xf32>
    %4 = math.exp %3 : vector<16x1xf32>
    %c0 = arith.constant 0 : index
    %c0_0 = arith.constant 0 : index
    %5 = vector.load %arg1[%c0, %c0_0] : memref<1x128xf32, #tpu.memory_space<vmem>>, vector<1x128xf32>
    %6 = vector.broadcast %4 : vector<16x1xf32> to vector<16x128xf32>
    %7 = vector.broadcast %5 : vector<1x128xf32> to vector<16x128xf32>
    %8 = arith.mulf %6, %7 : vector<16x128xf32>
    %9 = math.sin %8 : vector<16x128xf32>
    %10 = math.cos %8 : vector<16x128xf32>
    %11 = tpu.concatenate %9, %10 in 0 : vector<16x128xf32>, vector<16x128xf32> -> vector<32x128xf32>
    %c0_1 = arith.constant 0 : index
    %c0_2 = arith.constant 0 : index
    %12 = vector.load %arg2[%c0_1, %c0_2] : memref<32x128xf32, #tpu.memory_space<vmem>>, vector<32x128xf32>
    tpu.vector_store %arg2[%c0_1, %c0_2], %11 {strides = array<i32>} : memref<32x128xf32, #tpu.memory_space<vmem>>, vector<32x128xf32>,
    return
  }
  func.func @transform_0(%arg0: i32) -> (i32, i32) {
    %c0_i32 = arith.constant 0 : i32
    %c0_i32_0 = arith.constant 0 : i32
    return %c0_i32, %arg0 : i32, i32
  }
  func.func @transform_1(%arg0: i32) -> (i32, i32) {
    %c0_i32 = arith.constant 0 : i32
    %c0_i32_0 = arith.constant 0 : i32
    return %c0_i32, %arg0 : i32, i32
  }
}

</mosaic_0001>

<llo_original>
// kernel: tpu_custom_call.1
$region0: #{tpu_custom_call.1}
  #allocation0 [shape = 'u32[]', space=smem, size = 0x4, offset = 0x4, fixed_abs, tag = 'smem constant byte address 0x4 - core index']
  #allocation1 [shape = 'u32[72,128]{1,0:T(1,128)}', space=vmem, size = 0x9000, scoped, tag = 'internal scratch']
  %s0 = inlined_call_operand.hbm [shape: f32[1,128], index: 0, kind: input, shape index: {}]
  %s1 = inlined_call_operand.hbm [shape: f32[32,128], index: 1, kind: output, shape index: {}]
  %s2 = sld [smem:[#allocation0]]
  $region18: #{tpu_custom_call.1} parent=0
    _
  %s4 = ssub.s32 1, %s2
  %s5 = scalar_select 0, %s4, %s2
  $region1: #{tpu_custom_call.1} parent=0
    #allocation2 [shape = 'u8[512]{0}', space=vmem, size = 0x400, scoped, tag = 'input window, operand 0, single buffered']
    #allocation3 [shape = 's32[1]{0}', space=sflag, size = 0x4, scoped, tag = 'scoped memory for tpu_custom_call.1']
    #allocation4 [shape = 's32[1]{0}', space=sflag, size = 0x4, scoped, tag = 'scoped memory for tpu_custom_call.1']
    #allocation5 [shape = 'u8[16384]{0}', space=vmem, size = 0x4000, scoped, tag = 'output window, operand 0, single buffered']
    %6 = vsyncpa [#allocation3], 0
    %7 = vsyncpa [#allocation4], 0
    // Predicated region
    $region2: #{tpu_custom_call.1} parent=1 // pred_check
      _
    $region3: #{tpu_custom_call.1} parent=1 // pred_check_branch
      %9 = sbr.rel (0) target = $region5
    $region4: #{tpu_custom_call.1} parent=1 // pred_region
      %11 = vsyncadd [#allocation3], 0
      %s13 = sshll.u32 %s0, 4
      %s14 = int_to_ptr.hbm [resolvable:$true] %s13
      %s15 = sshll.u32 [#allocation2], 4
      %s16 = int_to_ptr.vmem [resolvable:$true] %s15
      %18 = dma.hbm_to_vmem [thread:$0]  %s14, 16, %s16, [#allocation3]
    $region5: #{tpu_custom_call.1} parent=1 // pred_fallthru
      _
    // Predicated region
    $region6: #{tpu_custom_call.1} parent=1 // pred_check
      _
    $region7: #{tpu_custom_call.1} parent=1 // pred_check_branch
      %20 = sbr.rel (0) target = $region9
    $region8: #{tpu_custom_call.1} parent=1 // pred_region
      %22 = dma.done [#allocation3], 16
    $region9: #{tpu_custom_call.1} parent=1 // pred_fallthru
      _
    %v23 = vlaneseq
    %v24 = vshrl.u32 %v23, 7
    %v25 = vadd.s32 %v24, 8
    %v26 = vcvt.s32.f32 %v24
    %v27 = vcvt.s32.f32 %v25
    %v28 = vmul.f32 %v26, -1.1512926
    %v29 = vmul.f32 %v27, -1.1512926
    %v30 = vmul.f32 %v28, 1.442695
    %v31 = vpow.pop %v30
    %v32 = vmul.f32 %v29, 1.442695
    %v33 = vpow.pop %v32
    %v34 = vld [vmem:[#allocation2] sm:$0x1]
    %v36 = vperm.slane %v34, 0
    %v38 = vmul.f32 %v31, %v36
    %v39 = vmul.f32 %v33, %v36
    %v40 = vand.u32 2147483647, %v38
    %vm41 = vcmp.le.f32.partialorder %v40, 0.7853982
    %vm42 = vcmp.lt.s32.totalorder %v38, 0
    %v43 = vand.u32 %v38, 2139095040
    %v44 = vshrl.u32 %v43, 23
    %v45 = vsub.s32 %v44, 127
    %v46 = vand.u32 2147483647, %v38
    %v47 = vand.u32 %v46, 8388607
    %v48 = vor.u32 %v47, 8388608
    %v49 = vsub.s32 0, %v48
    %v50 = vadd.s32 %v45, 1
    %vm51 = vcmp.gt.s32.totalorder %v50, 0
    %v52 = vsel %vm51, %v50, 0
    %v53 = vshrl.u32 %v52, 5
    %v54 = vand.u32 %v52, 31
    %v55 = vsub.s32 32, %v54
    %v56 = vshrl.u32 683565275, %v55
    %v57 = vshll.u32 683565275, %v54
    %v58 = vshrl.u32 2475754826, %v55
    %v59 = vor.u32 %v57, %v58
    %v60 = vshll.u32 2475754826, %v54
    %v61 = vshrl.u32 2131351028, %v55
    %v62 = vor.u32 %v60, %v61
    %v63 = vshll.u32 2131351028, %v54
    %v64 = vshrl.u32 2102212464, %v55
    %v65 = vor.u32 %v63, %v64
    %v66 = vshll.u32 2102212464, %v54
    %v67 = vshrl.u32 920167782, %v55
    %v68 = vor.u32 %v66, %v67
    %v69 = vshll.u32 920167782, %v54
    %v70 = vshrl.u32 1326507024, %v55
    %v71 = vor.u32 %v69, %v70
    %vm72 = vcmp.lt.s32.totalorder %v53, 1
    %vm73 = vcmp.lt.s32.totalorder %v53, 2
    %vm74 = vcmp.lt.s32.totalorder %v53, 3
    %vm75 = vcmp.lt.s32.totalorder %v53, 4
    %v76 = vsel %vm72, %v56, %v59
    %v77 = vsel %vm75, %v65, 2102212464
    %v78 = vsel %vm74, %v62, %v77
    %v79 = vsel %vm73, %v76, %v78
    %v80 = vsel %vm72, %v59, %v62
    %v81 = vsel %vm75, %v68, 920167782
    %v82 = vsel %vm74, %v65, %v81
    %v83 = vsel %vm73, %v80, %v82
    %v84 = vsel %vm72, %v62, %v65
    %v85 = vsel %vm75, %v71, 1326507024
    %v86 = vsel %vm74, %v68, %v85
    %v87 = vsel %vm73, %v84, %v86
    %v88 = vshll.u32 %v48, 8
    %v89 = vand.u32 %v88, 65535
    %v90 = vshrl.u32 %v88, 16
    %v91 = vand.u32 %v87, 65535
    %v92 = vshrl.u32 %v87, 16
    %v93 = vmul.u32 %v89, %v91
    %v94 = vmul.u32 %v89, %v92
    %v95 = vmul.u32 %v90, %v91
    %v96 = vmul.u32 %v90, %v92
    %v97 = vshll.u32 %v94, 16
    %v98 = vshrl.u32 %v94, 16
    %v99 = vshll.u32 %v95, 16
    %v100 = vshrl.u32 %v95, 16
    %vm101 = vc.u32 %v93, %v97
    %v102 = vsel %vm101, 1, 0
    %v103 = vadd.s32 %v93, %v97
    %v104 = vadd.s32 %v96, %v102
    %vm105 = vc.u32 %v103, %v99
    %v106 = vsel %vm105, 1, 0
    %v107 = vadd.s32 %v103, %v99
    %v108 = vadd.s32 %v104, %v106
    %v109 = vadd.s32 %v108, %v98
    %v110 = vadd.s32 %v109, %v100
    %v111 = vand.u32 %v88, 65535
    %v112 = vshrl.u32 %v88, 16
    %v113 = vand.u32 %v83, 65535
    %v114 = vshrl.u32 %v83, 16
    %v115 = vmul.u32 %v111, %v113
    %v116 = vmul.u32 %v111, %v114
    %v117 = vmul.u32 %v112, %v113
    %v118 = vmul.u32 %v112, %v114
    %v119 = vshll.u32 %v116, 16
    %v120 = vshrl.u32 %v116, 16
    %v121 = vshll.u32 %v117, 16
    %v122 = vshrl.u32 %v117, 16
    %vm123 = vc.u32 %v115, %v119
    %v124 = vsel %vm123, 1, 0
    %v125 = vadd.s32 %v115, %v119
    %v126 = vadd.s32 %v118, %v124
    %vm127 = vc.u32 %v125, %v121
    %v128 = vsel %vm127, 1, 0
    %v129 = vadd.s32 %v125, %v121
    %v130 = vadd.s32 %v126, %v128
    %v131 = vadd.s32 %v130, %v120
    %v132 = vadd.s32 %v131, %v122
    %v133 = vmul.u32 %v88, %v79
    %v134 = vadd.s32 %v110, %v129
    %vm135 = vc.u32 %v110, %v129
    %v136 = vadd.s32 %v132, 1
    %v137 = vsel %vm135, %v136, %v132
    %v138 = vadd.s32 %v133, %v137
    %v139 = vadd.s32 %v138, 536870912
    %v140 = vshrl.u32 %v139, 30
    %v141 = vshll.u32 %v140, 30
    %v142 = vsub.s32 %v138, %v141
    %vm143 = vcmp.lt.s32.totalorder %v142, 0
    %v144 = vsub.s32 0, %v142
    %v145 = vsel %vm143, %v144, %v142
    %v146 = vclz %v145
    %v147 = vsub.s32 %v146, 2
    %vm148 = vcmp.gt.s32.totalorder 0, %v147
    %v149 = vsel %vm148, 0, %v147
    %v150 = vsub.s32 32, %v149
    %v151 = vshll.u32 %v142, %v149
    %v152 = vshrl.u32 %v134, %v150
    %v153 = vor.u32 %v151, %v152
    %v154 = vsub.s32 4294967266, %v149
    %v155 = vadd.s32 %v154, 127
    %v156 = vshll.u32 %v155, 23
    %v157 = vor.u32 4788187, %v156
    %v158 = vand.u32 2147483647, %v157
    %v160 = vcvt.s32.f32 %v153
    %v161 = vmul.f32 %v160, %v158
    %v162 = vxor.u32 %v161, 2147483648
    %v163 = vsel %vm42, %v162, %v161
    %v164 = vsub.s32 4, %v140
    %v165 = vsel %vm42, %v164, %v140
    %v166 = vsel %vm41, %v38, %v163
    %v167 = vsel %vm41, 0, %v165
    %v168 = vmul.f32 %v166, %v166
    %v169 = vmul.f32 %v168, -0.001358992
    %v170 = vadd.f32 %v169, 0.041655596
    %v171 = vmul.f32 %v168, %v170
    %v172 = vadd.f32 %v171, -0.4999988
    %v173 = vmul.f32 %v168, %v172
    %v174 = vadd.f32 1.0, %v173
    %v175 = vmul.f32 %v166, %v166
    %v176 = vmul.f32 %v175, -0.00019511016
    %v177 = vadd.f32 %v176, 0.008332121
    %v178 = vmul.f32 %v175, %v177
    %v179 = vadd.f32 %v178, -0.16666654
    %v180 = vmul.f32 %v175, %v179
    %v181 = vadd.f32 %v180, 1.0
    %v182 = vmul.f32 %v181, %v166
    %vm183 = vweird.f32 %v38
    %v184 = vadd.s32 %v167, 3
    %v185 = vand.u32 %v184, 3
    %vm186 = vcmp.lt.s32.totalorder %v185, 2
    %vm187 = vcmp.eq.s32.totalorder %v185, 0
    %v188 = vxor.u32 %v182, 2147483648
    %v189 = vsel %vm187, %v174, %v188
    %vm190 = vcmp.eq.s32.totalorder %v185, 2
    %v191 = vxor.u32 %v174, 2147483648
    %v192 = vsel %vm190, %v191, %v182
    %v193 = vsel %vm186, %v189, %v192
    %v194 = vsel %vm183, nan, %v193
    %v195 = vand.u32 2147483647, %v39
    %vm196 = vcmp.le.f32.partialorder %v195, 0.7853982
    %vm197 = vcmp.lt.s32.totalorder %v39, 0
    %v198 = vand.u32 %v39, 2139095040
    %v199 = vshrl.u32 %v198, 23
    %v200 = vsub.s32 %v199, 127
    %v201 = vand.u32 2147483647, %v39
    %v202 = vand.u32 %v201, 8388607
    %v203 = vor.u32 %v202, 8388608
    %v204 = vsub.s32 0, %v203
    %v205 = vadd.s32 %v200, 1
    %vm206 = vcmp.gt.s32.totalorder %v205, 0
    %v207 = vsel %vm206, %v205, 0
    %v208 = vshrl.u32 %v207, 5
    %v209 = vand.u32 %v207, 31
    %v210 = vsub.s32 32, %v209
    %v211 = vshrl.u32 683565275, %v210
    %v212 = vshll.u32 683565275, %v209
    %v213 = vshrl.u32 2475754826, %v210
    %v214 = vor.u32 %v212, %v213
    %v215 = vshll.u32 2475754826, %v209
    %v216 = vshrl.u32 2131351028, %v210
    %v217 = vor.u32 %v215, %v216
    %v218 = vshll.u32 2131351028, %v209
    %v219 = vshrl.u32 2102212464, %v210
    %v220 = vor.u32 %v218, %v219
    %v221 = vshll.u32 2102212464, %v209
    %v222 = vshrl.u32 920167782, %v210
    %v223 = vor.u32 %v221, %v222
    %v224 = vshll.u32 920167782, %v209
    %v225 = vshrl.u32 1326507024, %v210
    %v226 = vor.u32 %v224, %v225
    %vm227 = vcmp.lt.s32.totalorder %v208, 1
    %vm228 = vcmp.lt.s32.totalorder %v208, 2
    %vm229 = vcmp.lt.s32.totalorder %v208, 3
    %vm230 = vcmp.lt.s32.totalorder %v208, 4
    %v231 = vsel %vm227, %v211, %v214
    %v232 = vsel %vm230, %v220, 2102212464
    %v233 = vsel %vm229, %v217, %v232
    %v234 = vsel %vm228, %v231, %v233
    %v235 = vsel %vm227, %v214, %v217
    %v236 = vsel %vm230, %v223, 920167782
    %v237 = vsel %vm229, %v220, %v236
    %v238 = vsel %vm228, %v235, %v237
    %v239 = vsel %vm227, %v217, %v220
    %v240 = vsel %vm230, %v226, 1326507024
    %v241 = vsel %vm229, %v223, %v240
    %v242 = vsel %vm228, %v239, %v241
    %v243 = vshll.u32 %v203, 8
    %v244 = vand.u32 %v243, 65535
    %v245 = vshrl.u32 %v243, 16
    %v246 = vand.u32 %v242, 65535
    %v247 = vshrl.u32 %v242, 16
    %v248 = vmul.u32 %v244, %v246
    %v249 = vmul.u32 %v244, %v247
    %v250 = vmul.u32 %v245, %v246
    %v251 = vmul.u32 %v245, %v247
    %v252 = vshll.u32 %v249, 16
    %v253 = vshrl.u32 %v249, 16
    %v254 = vshll.u32 %v250, 16
    %v255 = vshrl.u32 %v250, 16
    %vm256 = vc.u32 %v248, %v252
    %v257 = vsel %vm256, 1, 0
    %v258 = vadd.s32 %v248, %v252
    %v259 = vadd.s32 %v251, %v257
    %vm260 = vc.u32 %v258, %v254
    %v261 = vsel %vm260, 1, 0
    %v262 = vadd.s32 %v258, %v254
    %v263 = vadd.s32 %v259, %v261
    %v264 = vadd.s32 %v263, %v253
    %v265 = vadd.s32 %v264, %v255
    %v266 = vand.u32 %v243, 65535
    %v267 = vshrl.u32 %v243, 16
    %v268 = vand.u32 %v238, 65535
    %v269 = vshrl.u32 %v238, 16
    %v270 = vmul.u32 %v266, %v268
    %v271 = vmul.u32 %v266, %v269
    %v272 = vmul.u32 %v267, %v268
    %v273 = vmul.u32 %v267, %v269
    %v274 = vshll.u32 %v271, 16
    %v275 = vshrl.u32 %v271, 16
    %v276 = vshll.u32 %v272, 16
    %v277 = vshrl.u32 %v272, 16
    %vm278 = vc.u32 %v270, %v274
    %v279 = vsel %vm278, 1, 0
    %v280 = vadd.s32 %v270, %v274
    %v281 = vadd.s32 %v273, %v279
    %vm282 = vc.u32 %v280, %v276
    %v283 = vsel %vm282, 1, 0
    %v284 = vadd.s32 %v280, %v276
    %v285 = vadd.s32 %v281, %v283
    %v286 = vadd.s32 %v285, %v275
    %v287 = vadd.s32 %v286, %v277
    %v288 = vmul.u32 %v243, %v234
    %v289 = vadd.s32 %v265, %v284
    %vm290 = vc.u32 %v265, %v284
    %v291 = vadd.s32 %v287, 1
    %v292 = vsel %vm290, %v291, %v287
    %v293 = vadd.s32 %v288, %v292
    %v294 = vadd.s32 %v293, 536870912
    %v295 = vshrl.u32 %v294, 30
    %v296 = vshll.u32 %v295, 30
    %v297 = vsub.s32 %v293, %v296
    %vm298 = vcmp.lt.s32.totalorder %v297, 0
    %v299 = vsub.s32 0, %v297
    %v300 = vsel %vm298, %v299, %v297
    %v301 = vclz %v300
    %v302 = vsub.s32 %v301, 2
    %vm303 = vcmp.gt.s32.totalorder 0, %v302
    %v304 = vsel %vm303, 0, %v302
    %v305 = vsub.s32 32, %v304
    %v306 = vshll.u32 %v297, %v304
    %v307 = vshrl.u32 %v289, %v305
    %v308 = vor.u32 %v306, %v307
    %v309 = vsub.s32 4294967266, %v304
    %v310 = vadd.s32 %v309, 127
    %v311 = vshll.u32 %v310, 23
    %v312 = vor.u32 4788187, %v311
    %v313 = vand.u32 2147483647, %v312
    %v315 = vcvt.s32.f32 %v308
    %v316 = vmul.f32 %v315, %v313
    %v317 = vxor.u32 %v316, 2147483648
    %v318 = vsel %vm197, %v317, %v316
    %v319 = vsub.s32 4, %v295
    %v320 = vsel %vm197, %v319, %v295
    %v321 = vsel %vm196, %v39, %v318
    %v322 = vsel %vm196, 0, %v320
    %v323 = vmul.f32 %v321, %v321
    %v324 = vmul.f32 %v323, -0.001358992
    %v325 = vadd.f32 %v324, 0.041655596
    %v326 = vmul.f32 %v323, %v325
    %v327 = vadd.f32 %v326, -0.4999988
    %v328 = vmul.f32 %v323, %v327
    %v329 = vadd.f32 1.0, %v328
    %v330 = vmul.f32 %v321, %v321
    %v331 = vmul.f32 %v330, -0.00019511016
    %v332 = vadd.f32 %v331, 0.008332121
    %v333 = vmul.f32 %v330, %v332
    %v334 = vadd.f32 %v333, -0.16666654
    %v335 = vmul.f32 %v330, %v334
    %v336 = vadd.f32 %v335, 1.0
    %v337 = vmul.f32 %v336, %v321
    %vm338 = vweird.f32 %v39
    %v339 = vadd.s32 %v322, 3
    %v340 = vand.u32 %v339, 3
    %vm341 = vcmp.lt.s32.totalorder %v340, 2
    %vm342 = vcmp.eq.s32.totalorder %v340, 0
    %v343 = vxor.u32 %v337, 2147483648
    %v344 = vsel %vm342, %v329, %v343
    %vm345 = vcmp.eq.s32.totalorder %v340, 2
    %v346 = vxor.u32 %v329, 2147483648
    %v347 = vsel %vm345, %v346, %v337
    %v348 = vsel %vm341, %v344, %v347
    %v349 = vsel %vm338, nan, %v348
    %v350 = vand.u32 2147483647, %v38
    %vm351 = vcmp.le.f32.partialorder %v350, 0.7853982
    %vm352 = vcmp.lt.s32.totalorder %v38, 0
    %v353 = vand.u32 %v38, 2139095040
    %v354 = vshrl.u32 %v353, 23
    %v355 = vsub.s32 %v354, 127
    %v356 = vand.u32 2147483647, %v38
    %v357 = vand.u32 %v356, 8388607
    %v358 = vor.u32 %v357, 8388608
    %v359 = vsub.s32 0, %v358
    %v360 = vadd.s32 %v355, 1
    %vm361 = vcmp.gt.s32.totalorder %v360, 0
    %v362 = vsel %vm361, %v360, 0
    %v363 = vshrl.u32 %v362, 5
    %v364 = vand.u32 %v362, 31
    %v365 = vsub.s32 32, %v364
    %v366 = vshrl.u32 683565275, %v365
    %v367 = vshll.u32 683565275, %v364
    %v368 = vshrl.u32 2475754826, %v365
    %v369 = vor.u32 %v367, %v368
    %v370 = vshll.u32 2475754826, %v364
    %v371 = vshrl.u32 2131351028, %v365
    %v372 = vor.u32 %v370, %v371
    %v373 = vshll.u32 2131351028, %v364
    %v374 = vshrl.u32 2102212464, %v365
    %v375 = vor.u32 %v373, %v374
    %v376 = vshll.u32 2102212464, %v364
    %v377 = vshrl.u32 920167782, %v365
    %v378 = vor.u32 %v376, %v377
    %v379 = vshll.u32 920167782, %v364
    %v380 = vshrl.u32 1326507024, %v365
    %v381 = vor.u32 %v379, %v380
    %vm382 = vcmp.lt.s32.totalorder %v363, 1
    %vm383 = vcmp.lt.s32.totalorder %v363, 2
    %vm384 = vcmp.lt.s32.totalorder %v363, 3
    %vm385 = vcmp.lt.s32.totalorder %v363, 4
    %v386 = vsel %vm382, %v366, %v369
    %v387 = vsel %vm385, %v375, 2102212464
    %v388 = vsel %vm384, %v372, %v387
    %v389 = vsel %vm383, %v386, %v388
    %v390 = vsel %vm382, %v369, %v372
    %v391 = vsel %vm385, %v378, 920167782
    %v392 = vsel %vm384, %v375, %v391
    %v393 = vsel %vm383, %v390, %v392
    %v394 = vsel %vm382, %v372, %v375
    %v395 = vsel %vm385, %v381, 1326507024
    %v396 = vsel %vm384, %v378, %v395
    %v397 = vsel %vm383, %v394, %v396
    %v398 = vshll.u32 %v358, 8
    %v399 = vand.u32 %v398, 65535
    %v400 = vshrl.u32 %v398, 16
    %v401 = vand.u32 %v397, 65535
    %v402 = vshrl.u32 %v397, 16
    %v403 = vmul.u32 %v399, %v401
    %v404 = vmul.u32 %v399, %v402
    %v405 = vmul.u32 %v400, %v401
    %v406 = vmul.u32 %v400, %v402
    %v407 = vshll.u32 %v404, 16
    %v408 = vshrl.u32 %v404, 16
    %v409 = vshll.u32 %v405, 16
    %v410 = vshrl.u32 %v405, 16
    %vm411 = vc.u32 %v403, %v407
    %v412 = vsel %vm411, 1, 0
    %v413 = vadd.s32 %v403, %v407
    %v414 = vadd.s32 %v406, %v412
    %vm415 = vc.u32 %v413, %v409
    %v416 = vsel %vm415, 1, 0
    %v417 = vadd.s32 %v413, %v409
    %v418 = vadd.s32 %v414, %v416
    %v419 = vadd.s32 %v418, %v408
    %v420 = vadd.s32 %v419, %v410
    %v421 = vand.u32 %v398, 65535
    %v422 = vshrl.u32 %v398, 16
    %v423 = vand.u32 %v393, 65535
    %v424 = vshrl.u32 %v393, 16
    %v425 = vmul.u32 %v421, %v423
    %v426 = vmul.u32 %v421, %v424
    %v427 = vmul.u32 %v422, %v423
    %v428 = vmul.u32 %v422, %v424
    %v429 = vshll.u32 %v426, 16
    %v430 = vshrl.u32 %v426, 16
    %v431 = vshll.u32 %v427, 16
    %v432 = vshrl.u32 %v427, 16
    %vm433 = vc.u32 %v425, %v429
    %v434 = vsel %vm433, 1, 0
    %v435 = vadd.s32 %v425, %v429
    %v436 = vadd.s32 %v428, %v434
    %vm437 = vc.u32 %v435, %v431
    %v438 = vsel %vm437, 1, 0
    %v439 = vadd.s32 %v435, %v431
    %v440 = vadd.s32 %v436, %v438
    %v441 = vadd.s32 %v440, %v430
    %v442 = vadd.s32 %v441, %v432
    %v443 = vmul.u32 %v398, %v389
    %v444 = vadd.s32 %v420, %v439
    %vm445 = vc.u32 %v420, %v439
    %v446 = vadd.s32 %v442, 1
    %v447 = vsel %vm445, %v446, %v442
    %v448 = vadd.s32 %v443, %v447
    %v449 = vadd.s32 %v448, 536870912
    %v450 = vshrl.u32 %v449, 30
    %v451 = vshll.u32 %v450, 30
    %v452 = vsub.s32 %v448, %v451
    %vm453 = vcmp.lt.s32.totalorder %v452, 0
    %v454 = vsub.s32 0, %v452
    %v455 = vsel %vm453, %v454, %v452
    %v456 = vclz %v455
    %v457 = vsub.s32 %v456, 2
    %vm458 = vcmp.gt.s32.totalorder 0, %v457
    %v459 = vsel %vm458, 0, %v457
    %v460 = vsub.s32 32, %v459
    %v461 = vshll.u32 %v452, %v459
    %v462 = vshrl.u32 %v444, %v460
    %v463 = vor.u32 %v461, %v462
    %v464 = vsub.s32 4294967266, %v459
    %v465 = vadd.s32 %v464, 127
    %v466 = vshll.u32 %v465, 23
    %v467 = vor.u32 4788187, %v466
    %v468 = vand.u32 2147483647, %v467
    %v470 = vcvt.s32.f32 %v463
    %v471 = vmul.f32 %v470, %v468
    %v472 = vxor.u32 %v471, 2147483648
    %v473 = vsel %vm352, %v472, %v471
    %v474 = vsub.s32 4, %v450
    %v475 = vsel %vm352, %v474, %v450
    %v476 = vsel %vm351, %v38, %v473
    %v477 = vsel %vm351, 0, %v475
    %v478 = vmul.f32 %v476, %v476
    %v479 = vmul.f32 %v478, -0.001358992
    %v480 = vadd.f32 %v479, 0.041655596
    %v481 = vmul.f32 %v478, %v480
    %v482 = vadd.f32 %v481, -0.4999988
    %v483 = vmul.f32 %v478, %v482
    %v484 = vadd.f32 1.0, %v483
    %v485 = vmul.f32 %v476, %v476
    %v486 = vmul.f32 %v485, -0.00019511016
    %v487 = vadd.f32 %v486, 0.008332121
    %v488 = vmul.f32 %v485, %v487
    %v489 = vadd.f32 %v488, -0.16666654
    %v490 = vmul.f32 %v485, %v489
    %v491 = vadd.f32 %v490, 1.0
    %v492 = vmul.f32 %v491, %v476
    %vm493 = vweird.f32 %v38
    %v494 = vand.u32 %v477, 3
    %vm495 = vcmp.lt.s32.totalorder %v494, 2
    %vm496 = vcmp.eq.s32.totalorder %v494, 0
    %v497 = vxor.u32 %v492, 2147483648
    %v498 = vsel %vm496, %v484, %v497
    %vm499 = vcmp.eq.s32.totalorder %v494, 2
    %v500 = vxor.u32 %v484, 2147483648
    %v501 = vsel %vm499, %v500, %v492
    %v502 = vsel %vm495, %v498, %v501
    %v503 = vsel %vm493, nan, %v502
    %v504 = vand.u32 2147483647, %v39
    %vm505 = vcmp.le.f32.partialorder %v504, 0.7853982
    %vm506 = vcmp.lt.s32.totalorder %v39, 0
    %v507 = vand.u32 %v39, 2139095040
    %v508 = vshrl.u32 %v507, 23
    %v509 = vsub.s32 %v508, 127
    %v510 = vand.u32 2147483647, %v39
    %v511 = vand.u32 %v510, 8388607
    %v512 = vor.u32 %v511, 8388608
    %v513 = vsub.s32 0, %v512
    %v514 = vadd.s32 %v509, 1
    %vm515 = vcmp.gt.s32.totalorder %v514, 0
    %v516 = vsel %vm515, %v514, 0
    %v517 = vshrl.u32 %v516, 5
    %v518 = vand.u32 %v516, 31
    %v519 = vsub.s32 32, %v518
    %v520 = vshrl.u32 683565275, %v519
    %v521 = vshll.u32 683565275, %v518
    %v522 = vshrl.u32 2475754826, %v519
    %v523 = vor.u32 %v521, %v522
    %v524 = vshll.u32 2475754826, %v518
    %v525 = vshrl.u32 2131351028, %v519
    %v526 = vor.u32 %v524, %v525
    %v527 = vshll.u32 2131351028, %v518
    %v528 = vshrl.u32 2102212464, %v519
    %v529 = vor.u32 %v527, %v528
    %v530 = vshll.u32 2102212464, %v518
    %v531 = vshrl.u32 920167782, %v519
    %v532 = vor.u32 %v530, %v531
    %v533 = vshll.u32 920167782, %v518
    %v534 = vshrl.u32 1326507024, %v519
    %v535 = vor.u32 %v533, %v534
    %vm536 = vcmp.lt.s32.totalorder %v517, 1
    %vm537 = vcmp.lt.s32.totalorder %v517, 2
    %vm538 = vcmp.lt.s32.totalorder %v517, 3
    %vm539 = vcmp.lt.s32.totalorder %v517, 4
    %v540 = vsel %vm536, %v520, %v523
    %v541 = vsel %vm539, %v529, 2102212464
    %v542 = vsel %vm538, %v526, %v541
    %v543 = vsel %vm537, %v540, %v542
    %v544 = vsel %vm536, %v523, %v526
    %v545 = vsel %vm539, %v532, 920167782
    %v546 = vsel %vm538, %v529, %v545
    %v547 = vsel %vm537, %v544, %v546
    %v548 = vsel %vm536, %v526, %v529
    %v549 = vsel %vm539, %v535, 1326507024
    %v550 = vsel %vm538, %v532, %v549
    %v551 = vsel %vm537, %v548, %v550
    %v552 = vshll.u32 %v512, 8
    %v553 = vand.u32 %v552, 65535
    %v554 = vshrl.u32 %v552, 16
    %v555 = vand.u32 %v551, 65535
    %v556 = vshrl.u32 %v551, 16
    %v557 = vmul.u32 %v553, %v555
    %v558 = vmul.u32 %v553, %v556
    %v559 = vmul.u32 %v554, %v555
    %v560 = vmul.u32 %v554, %v556
    %v561 = vshll.u32 %v558, 16
    %v562 = vshrl.u32 %v558, 16
    %v563 = vshll.u32 %v559, 16
    %v564 = vshrl.u32 %v559, 16
    %vm565 = vc.u32 %v557, %v561
    %v566 = vsel %vm565, 1, 0
    %v567 = vadd.s32 %v557, %v561
    %v568 = vadd.s32 %v560, %v566
    %vm569 = vc.u32 %v567, %v563
    %v570 = vsel %vm569, 1, 0
    %v571 = vadd.s32 %v567, %v563
    %v572 = vadd.s32 %v568, %v570
    %v573 = vadd.s32 %v572, %v562
    %v574 = vadd.s32 %v573, %v564
    %v575 = vand.u32 %v552, 65535
    %v576 = vshrl.u32 %v552, 16
    %v577 = vand.u32 %v547, 65535
    %v578 = vshrl.u32 %v547, 16
    %v579 = vmul.u32 %v575, %v577
    %v580 = vmul.u32 %v575, %v578
    %v581 = vmul.u32 %v576, %v577
    %v582 = vmul.u32 %v576, %v578
    %v583 = vshll.u32 %v580, 16
    %v584 = vshrl.u32 %v580, 16
    %v585 = vshll.u32 %v581, 16
    %v586 = vshrl.u32 %v581, 16
    %vm587 = vc.u32 %v579, %v583
    %v588 = vsel %vm587, 1, 0
    %v589 = vadd.s32 %v579, %v583
    %v590 = vadd.s32 %v582, %v588
    %vm591 = vc.u32 %v589, %v585
    %v592 = vsel %vm591, 1, 0
    %v593 = vadd.s32 %v589, %v585
    %v594 = vadd.s32 %v590, %v592
    %v595 = vadd.s32 %v594, %v584
    %v596 = vadd.s32 %v595, %v586
    %v597 = vmul.u32 %v552, %v543
    %v598 = vadd.s32 %v574, %v593
    %vm599 = vc.u32 %v574, %v593
    %v600 = vadd.s32 %v596, 1
    %v601 = vsel %vm599, %v600, %v596
    %v602 = vadd.s32 %v597, %v601
    %v603 = vadd.s32 %v602, 536870912
    %v604 = vshrl.u32 %v603, 30
    %v605 = vshll.u32 %v604, 30
    %v606 = vsub.s32 %v602, %v605
    %vm607 = vcmp.lt.s32.totalorder %v606, 0
    %v608 = vsub.s32 0, %v606
    %v609 = vsel %vm607, %v608, %v606
    %v610 = vclz %v609
    %v611 = vsub.s32 %v610, 2
    %vm612 = vcmp.gt.s32.totalorder 0, %v611
    %v613 = vsel %vm612, 0, %v611
    %v614 = vsub.s32 32, %v613
    %v615 = vshll.u32 %v606, %v613
    %v616 = vshrl.u32 %v598, %v614
    %v617 = vor.u32 %v615, %v616
    %v618 = vsub.s32 4294967266, %v613
    %v619 = vadd.s32 %v618, 127
    %v620 = vshll.u32 %v619, 23
    %v621 = vor.u32 4788187, %v620
    %v622 = vand.u32 2147483647, %v621
    %v624 = vcvt.s32.f32 %v617
    %v625 = vmul.f32 %v624, %v622
    %v626 = vxor.u32 %v625, 2147483648
    %v627 = vsel %vm506, %v626, %v625
    %v628 = vsub.s32 4, %v604
    %v629 = vsel %vm506, %v628, %v604
    %v630 = vsel %vm505, %v39, %v627
    %v631 = vsel %vm505, 0, %v629
    %v632 = vmul.f32 %v630, %v630
    %v633 = vmul.f32 %v632, -0.001358992
    %v634 = vadd.f32 %v633, 0.041655596
    %v635 = vmul.f32 %v632, %v634
    %v636 = vadd.f32 %v635, -0.4999988
    %v637 = vmul.f32 %v632, %v636
    %v638 = vadd.f32 1.0, %v637
    %v639 = vmul.f32 %v630, %v630
    %v640 = vmul.f32 %v639, -0.00019511016
    %v641 = vadd.f32 %v640, 0.008332121
    %v642 = vmul.f32 %v639, %v641
    %v643 = vadd.f32 %v642, -0.16666654
    %v644 = vmul.f32 %v639, %v643
    %v645 = vadd.f32 %v644, 1.0
    %v646 = vmul.f32 %v645, %v630
    %vm647 = vweird.f32 %v39
    %v648 = vand.u32 %v631, 3
    %vm649 = vcmp.lt.s32.totalorder %v648, 2
    %vm650 = vcmp.eq.s32.totalorder %v648, 0
    %v651 = vxor.u32 %v646, 2147483648
    %v652 = vsel %vm650, %v638, %v651
    %vm653 = vcmp.eq.s32.totalorder %v648, 2
    %v654 = vxor.u32 %v638, 2147483648
    %v655 = vsel %vm653, %v654, %v646
    %v656 = vsel %vm649, %v652, %v655
    %v657 = vsel %vm647, nan, %v656
    %658 = vst [vmem:[#allocation5] sm:$0xff] %v194
    %659 = vst [vmem:[#allocation5 + $0x8] sm:$0xff] %v349
    %660 = vst [vmem:[#allocation5 + $0x10] sm:$0xff] %v503
    %661 = vst [vmem:[#allocation5 + $0x18] sm:$0xff] %v657
    // Predicated region
    $region10: #{tpu_custom_call.1} parent=1 // pred_check
      _
    $region11: #{tpu_custom_call.1} parent=1 // pred_check_branch
      %663 = sbr.rel (0) target = $region13
    $region12: #{tpu_custom_call.1} parent=1 // pred_region
      %665 = vsyncadd [#allocation4], 0
      %s666 = sshll.u32 [#allocation5], 4
      %s667 = int_to_ptr.vmem [resolvable:$true] %s666
      %s668 = sshll.u32 %s1, 4
      %s669 = int_to_ptr.hbm [resolvable:$true] %s668
      %674 = dma.vmem_to_hbm [thread:$0]  %s667, 512, %s669, [#allocation4], 128, 128, 8
    $region13: #{tpu_custom_call.1} parent=1 // pred_fallthru
      _
    // Predicated region
    $region14: #{tpu_custom_call.1} parent=1 // pred_check
      _
    $region15: #{tpu_custom_call.1} parent=1 // pred_check_branch
      %676 = sbr.rel (0) target = $region17
    $region16: #{tpu_custom_call.1} parent=1 // pred_region
      %678 = dma.done [#allocation4], 512
    $region17: #{tpu_custom_call.1} parent=1 // pred_fallthru
      _
    %679 = vsyncpa [#allocation3], 1
    %680 = vsyncpa [#allocation4], 1

</llo_original>
